<compile_context>
chip_gen: v7x
topology: tpu7x:2x2x1
jax: 0.10.0
libtpu: 0.0.40
codegen_flags: <defaults>
</compile_context>

<pallas_src>
import functools

import jax
import jax.numpy as jnp
from jax.experimental import pallas as pl
from jax.experimental.pallas import tpu as pltpu


def _round_up(a, m):
    return (a + m - 1) // m * m


# ---------------------------------------------------------------------------
# Pallas kernel: one (batch, time-tile) block of the residual block.
# ---------------------------------------------------------------------------
def _temporal_block_kernel(x_ref, halo_ref, w1_ref, b1_ref, w2_ref, b2_ref,
                           *rest, TL, HALO, HALO2, P, K, dilation,
                           has_downsample, compute_dtype):
    if has_downsample:
        wd_ref, bd_ref, o_ref, xbuf, hbuf = rest
    else:
        o_ref, xbuf, hbuf = rest

    NH = HALO2 + TL                 # rows of hidden activation computed here
    OFF1 = HALO - HALO2 - P         # >= 0 by construction
    OFF2 = HALO2 - P                # >= 0 by construction

    # Stage halo + current tile contiguously in VMEM so every conv tap is a
    # simple (sublane-offset) ref slice instead of a big live value.
    x_t = x_ref[0]                                   # (TL, Cin_p) f32
    xbuf[pl.ds(0, HALO), :] = halo_ref[0]
    xbuf[pl.ds(HALO, TL), :] = x_t

    # ---- conv1: fused im2col matmul over K dilated taps ------------------
    taps1 = [xbuf[pl.ds(OFF1 + k * dilation, NH), :] for k in range(K)]
    patch1 = jnp.concatenate(taps1, axis=1).astype(compute_dtype)  # (NH, K*Cin_p)
    h = jnp.dot(patch1, w1_ref[...], preferred_element_type=jnp.float32)
    h = jnp.maximum(h + b1_ref[...], 0.0)            # (NH, Cout_p) f32

    # Rows corresponding to t < 0 must be *zero* for conv2 (conv2's causal
    # padding pads the hidden sequence with zeros, not with relu(b1)).
    t0 = pl.program_id(1) * TL
    row_t = t0 - HALO2 + jax.lax.broadcasted_iota(jnp.int32, (NH, 1), 0)
    h = jnp.where(row_t >= 0, h, 0.0)
    hbuf[...] = h.astype(hbuf.dtype)

    # ---- conv2: fused im2col matmul over K dilated taps ------------------
    taps2 = [hbuf[pl.ds(OFF2 + k * dilation, TL), :] for k in range(K)]
    patch2 = jnp.concatenate(taps2, axis=1)          # (TL, K*Cout_p) compute_dtype
    out = jnp.dot(patch2, w2_ref[...], preferred_element_type=jnp.float32)
    out = jnp.maximum(out + b2_ref[...], 0.0)        # (TL, Cout_p) f32

    # ---- residual branch --------------------------------------------------
    if has_downsample:
        res = jnp.dot(x_t.astype(compute_dtype), wd_ref[...],
                      preferred_element_type=jnp.float32) + bd_ref[...]
    else:
        res = x_t.astype(jnp.float32)

    o_ref[0] = jnp.maximum(out + res, 0.0).astype(o_ref.dtype)


# ---------------------------------------------------------------------------
# Wrapper: weight norm, layout plumbing (lane-dense channels), pallas_call.
# ---------------------------------------------------------------------------
def temporal_block_forward(x, params, *, kernel_size, stride, dilation, padding,
                           time_tile=None, compute_dtype=jnp.float32):
    """x: (B, Cin, L) NCW float32.  Returns (B, Cout, L)."""
    assert stride == 1, "TCN TemporalBlock uses stride=1"
    assert padding == (kernel_size - 1) * dilation, \
        "chomp-causal semantics require padding == (kernel_size-1)*dilation"

    B, Cin, L = x.shape
    K, d, P = kernel_size, dilation, padding

    # weight_norm: w = g * v / ||v||  (norm over (in_ch, k) per out channel)
    def wn(v, g):
        nrm = jnp.sqrt(jnp.sum(v * v, axis=(1, 2), keepdims=True))
        return g[:, None, None] * v / nrm

    w1 = wn(params["v1"], params["g1"])              # (Cout, Cin, K)
    w2 = wn(params["v2"], params["g2"])              # (Cout, Cout, K)
    Cout = w1.shape[0]
    has_downsample = Cin != Cout

    LANE = 128
    Cin_p = _round_up(Cin, LANE)
    Cout_p = _round_up(Cout, LANE)

    # --- time tiling with halo (halo recompute keeps tiles independent) ---
    HALO2 = _round_up(max(P, 1), 8)          # hidden-context rows recomputed
    HALO = _round_up(HALO2 + P, 8)           # x-context rows per tile
    if time_tile is None:
        time_tile = min(512, _round_up(L, 8))
    TL = _round_up(time_tile, 8)
    nT = pl.cdiv(L, TL)
    L_pad = nT * TL
    NH = HALO2 + TL

    # --- weights: (Cout, Cin, K) -> flattened im2col layout (K*Cin_p, Cout_p)
    def flatten_w(w, cin, cin_p):
        wt = jnp.transpose(w, (2, 1, 0))                                  # (K, cin, Cout)
        wt = jnp.pad(wt, ((0, 0), (0, cin_p - cin), (0, Cout_p - Cout)))
        return wt.reshape(K * cin_p, Cout_p).astype(compute_dtype)

    w1_f = flatten_w(w1, Cin, Cin_p)
    w2_f = flatten_w(w2, Cout, Cout_p)
    b1 = jnp.pad(params["b1"], (0, Cout_p - Cout)).reshape(1, Cout_p).astype(jnp.float32)
    b2 = jnp.pad(params["b2"], (0, Cout_p - Cout)).reshape(1, Cout_p).astype(jnp.float32)

    # --- inputs: NCW -> NWC, lane-pad channels, pad time to tile multiple ---
    x_nwc = jnp.transpose(x, (0, 2, 1))                                   # (B, L, Cin)
    x_cp = jnp.pad(x_nwc, ((0, 0), (0, L_pad - L), (0, Cin_p - Cin)))     # (B, L_pad, Cin_p)

    # small halo tensor: rows [ti*TL - HALO, ti*TL) of x, zeros for t < 0
    t_idx = (jnp.arange(nT) * TL)[:, None] + jnp.arange(HALO)[None, :] - HALO   # (nT, HALO)
    gathered = x_cp[:, jnp.clip(t_idx, 0, L_pad - 1), :]                  # (B, nT, HALO, Cin_p)
    halo = jnp.where((t_idx >= 0)[None, :, :, None], gathered, 0.0)
    halo = halo.reshape(B, nT * HALO, Cin_p)

    kernel = functools.partial(
        _temporal_block_kernel, TL=TL, HALO=HALO, HALO2=HALO2, P=P, K=K,
        dilation=d, has_downsample=has_downsample, compute_dtype=compute_dtype)

    in_specs = [
        pl.BlockSpec((1, TL, Cin_p), lambda b, t: (b, t, 0)),             # x tile
        pl.BlockSpec((1, HALO, Cin_p), lambda b, t: (b, t, 0)),           # x halo
        pl.BlockSpec((K * Cin_p, Cout_p), lambda b, t: (0, 0)),           # w1 (im2col)
        pl.BlockSpec((1, Cout_p), lambda b, t: (0, 0)),                   # b1
        pl.BlockSpec((K * Cout_p, Cout_p), lambda b, t: (0, 0)),          # w2 (im2col)
        pl.BlockSpec((1, Cout_p), lambda b, t: (0, 0)),                   # b2
    ]
    args = [x_cp, halo, w1_f, b1, w2_f, b2]
    if has_downsample:
        wd = params["wd"][:, :, 0]                                        # (Cout, Cin)
        wd_f = jnp.pad(wd.T, ((0, Cin_p - Cin), (0, Cout_p - Cout))).astype(compute_dtype)
        bd = jnp.pad(params["bd"], (0, Cout_p - Cout)).reshape(1, Cout_p).astype(jnp.float32)
        in_specs += [pl.BlockSpec((Cin_p, Cout_p), lambda b, t: (0, 0)),  # wd
                     pl.BlockSpec((1, Cout_p), lambda b, t: (0, 0))]      # bd
        args += [wd_f, bd]

    flops = 2 * B * L * (K * Cin * Cout + K * Cout * Cout
                         + (Cin * Cout if has_downsample else 0))
    bytes_accessed = 4 * (B * L * (Cin + Cout)) + 4 * (w1_f.size + w2_f.size)
    cost = pl.CostEstimate(flops=int(flops), transcendentals=0,
                           bytes_accessed=int(bytes_accessed))

    out_nwc = pl.pallas_call(
        kernel,
        out_shape=jax.ShapeDtypeStruct((B, L_pad, Cout_p), x.dtype),
        grid_spec=pltpu.PrefetchScalarGridSpec(
            num_scalar_prefetch=0,
            grid=(B, nT),
            in_specs=in_specs,
            out_specs=pl.BlockSpec((1, TL, Cout_p), lambda b, t: (b, t, 0)),
            scratch_shapes=[
                pltpu.VMEM((HALO + TL, Cin_p), jnp.float32),   # staged x (halo+tile)
                pltpu.VMEM((NH, Cout_p), compute_dtype),       # hidden activations
            ],
        ),
        compiler_params=pltpu.CompilerParams(
            dimension_semantics=("parallel", "parallel"),
            vmem_limit_bytes=32 * 1024 * 1024),
        cost_estimate=cost,
    )(*args)

    out = out_nwc[:, :L, :Cout]                                           # drop pads
    return jnp.transpose(out, (0, 2, 1))                                  # (B, Cout, L)


# ---------------------------------------------------------------------------
# Pure-JAX reference (same math, lax conv) for validation.
# ---------------------------------------------------------------------------
def temporal_block_reference(x, params, *, kernel_size, stride, dilation, padding):
    K, d, p = kernel_size, dilation, padding
    B, Cin, L = x.shape

    def wn(v, g):
        nrm = jnp.sqrt(jnp.sum(v * v, axis=(1, 2), keepdims=True))
        return g[:, None, None] * v / nrm

    w1 = wn(params["v1"], params["g1"])
    w2 = wn(params["v2"], params["g2"])
    Cout = w1.shape[0]

    def conv_chomp(xc, w, b):
        xp = jnp.pad(xc, ((0, 0), (0, 0), (p, p)))
        y = jax.lax.conv_general_dilated(
            xp, w, window_strides=(stride,), padding="VALID",
            rhs_dilation=(d,), dimension_numbers=("NCH", "OIH", "NCH"))
        y = y + b[None, :, None]
        return y[:, :, :L]                       # Chomp1d

    h = jax.nn.relu(conv_chomp(x, w1, params["b1"]))
    o = jax.nn.relu(conv_chomp(h, w2, params["b2"]))
    if Cin != Cout:
        res = jnp.einsum("oc,bcl->bol", params["wd"][:, :, 0], x) \
            + params["bd"][None, :, None]
    else:
        res = x
    return jax.nn.relu(o + res)


# ---------------------------------------------------------------------------
if __name__ == "__main__":
    # TemporalBlock(n_inputs=4, n_outputs=8, kernel_size=3, stride=1,
    #               dilation=2, padding=4, dropout=0.2)  -- dropout inactive (eval)
    B, Cin, Cout, L = 2, 4, 8, 16
    K, stride, dilation = 3, 1, 2
    padding = (K - 1) * dilation

    key = jax.random.PRNGKey(0)
    ks = jax.random.split(key, 8)
    params = {
        "v1": jax.random.normal(ks[0], (Cout, Cin, K), jnp.float32) * 0.3,
        "g1": jax.random.uniform(ks[1], (Cout,), jnp.float32, 0.5, 1.5),
        "b1": jax.random.normal(ks[2], (Cout,), jnp.float32) * 0.1,
        "v2": jax.random.normal(ks[3], (Cout, Cout, K), jnp.float32) * 0.3,
        "g2": jax.random.uniform(ks[4], (Cout,), jnp.float32, 0.5, 1.5),
        "b2": jax.random.normal(ks[5], (Cout,), jnp.float32) * 0.1,
        "wd": jax.random.normal(ks[6], (Cout, Cin, 1), jnp.float32) * 0.3,
        "bd": jax.random.normal(ks[7], (Cout,), jnp.float32) * 0.1,
    }
    x = jax.random.normal(jax.random.PRNGKey(1), (B, Cin, L), jnp.float32)

    # time_tile=8 -> 2 time tiles per batch element, exercising the halo path.
    out = temporal_block_forward(x, params, kernel_size=K, stride=stride,
                                 dilation=dilation, padding=padding,
                                 time_tile=8, compute_dtype=jnp.float32)
    out = jax.block_until_ready(out)

    ref = temporal_block_reference(x, params, kernel_size=K, stride=stride,
                                   dilation=dilation, padding=padding)
    ref = jax.block_until_ready(ref)

    assert out.shape == (B, Cout, L), out.shape
    if not jnp.allclose(out, ref, atol=1e-4, rtol=1e-4):
        raise AssertionError("Pallas kernel output does not match reference")
    print("KERNEL_OK")
</pallas_src>

<mosaic_0001>
module attributes {stable_mosaic.version = 11 : i64} {
  func.func @_temporal_block_kernel(%arg0: i32, %arg1: i32, %arg2: memref<1x8x128xf32, #tpu.memory_space<vmem>>, %arg3: memref<1x16x128xf32, #tpu.memory_space<vmem>>, %arg4: memref<384x128xf32, #tpu.memory_space<vmem>>, %arg5: memref<1x128xf32, #tpu.memory_space<vmem>>, %arg6: memref<384x128xf32, #tpu.memory_space<vmem>>, %arg7: memref<1x128xf32, #tpu.memory_space<vmem>>, %arg8: memref<128x128xf32, #tpu.memory_space<vmem>>, %arg9: memref<1x128xf32, #tpu.memory_space<vmem>>, %arg10: memref<1x8x128xf32, #tpu.memory_space<vmem>>, %arg11: memref<24x128xf32, #tpu.memory_space<vmem>>, %arg12: memref<16x128xf32, #tpu.memory_space<vmem>>) attributes {dimension_semantics = [#tpu.dimension_semantics<parallel>, #tpu.dimension_semantics<parallel>], iteration_bounds = array<i64: 2, 2>, scalar_prefetch = 0 : i64, scratch_operands = 2 : i64, tpu.core_type = #tpu.core_type<tc>, window_params = [{transform_indices = @transform_0, window_bounds = array<i64: 1, 8, 128>}, {transform_indices = @transform_1, window_bounds = array<i64: 1, 16, 128>}, {pipeline_mode = #tpu.pipeline_mode<synchronous>, transform_indices = @transform_2, window_bounds = array<i64: 384, 128>}, {pipeline_mode = #tpu.pipeline_mode<synchronous>, transform_indices = @transform_3, window_bounds = array<i64: 1, 128>}, {pipeline_mode = #tpu.pipeline_mode<synchronous>, transform_indices = @transform_4, window_bounds = array<i64: 384, 128>}, {pipeline_mode = #tpu.pipeline_mode<synchronous>, transform_indices = @transform_5, window_bounds = array<i64: 1, 128>}, {pipeline_mode = #tpu.pipeline_mode<synchronous>, transform_indices = @transform_6, window_bounds = array<i64: 128, 128>}, {pipeline_mode = #tpu.pipeline_mode<synchronous>, transform_indices = @transform_7, window_bounds = array<i64: 1, 128>}, {transform_indices = @transform_8, window_bounds = array<i64: 1, 8, 128>}]} {
    %c0 = arith.constant 0 : index
    %c0_0 = arith.constant 0 : index
    %c0_1 = arith.constant 0 : index
    %0 = vector.load %arg2[%c0, %c0_0, %c0_1] : memref<1x8x128xf32, #tpu.memory_space<vmem>>, vector<1x8x128xf32>
    %1 = vector.shape_cast %0 : vector<1x8x128xf32> to vector<8x128xf32>
    %c0_2 = arith.constant 0 : index
    %c0_3 = arith.constant 0 : index
    %c0_4 = arith.constant 0 : index
    %2 = vector.load %arg3[%c0_2, %c0_3, %c0_4] : memref<1x16x128xf32, #tpu.memory_space<vmem>>, vector<1x16x128xf32>
    %3 = vector.shape_cast %2 : vector<1x16x128xf32> to vector<16x128xf32>
    %c0_5 = arith.constant 0 : index
    %c0_6 = arith.constant 0 : index
    %4 = vector.load %arg11[%c0_5, %c0_6] : memref<24x128xf32, #tpu.memory_space<vmem>>, vector<16x128xf32>
    tpu.vector_store %arg11[%c0_5, %c0_6], %3 {strides = array<i32>} : memref<24x128xf32, #tpu.memory_space<vmem>>, vector<16x128xf32>,
    %c16 = arith.constant 16 : index
    %c0_7 = arith.constant 0 : index
    %5 = vector.load %arg11[%c16, %c0_7] : memref<24x128xf32, #tpu.memory_space<vmem>>, vector<8x128xf32>
    tpu.vector_store %arg11[%c16, %c0_7], %1 {strides = array<i32>} : memref<24x128xf32, #tpu.memory_space<vmem>>, vector<8x128xf32>,
    %c4 = arith.constant 4 : index
    %c0_8 = arith.constant 0 : index
    %6 = vector.load %arg11[%c4, %c0_8] : memref<24x128xf32, #tpu.memory_space<vmem>>, vector<16x128xf32>
    %c6 = arith.constant 6 : index
    %c0_9 = arith.constant 0 : index
    %7 = vector.load %arg11[%c6, %c0_9] : memref<24x128xf32, #tpu.memory_space<vmem>>, vector<16x128xf32>
    %c8 = arith.constant 8 : index
    %c0_10 = arith.constant 0 : index
    %8 = vector.load %arg11[%c8, %c0_10] : memref<24x128xf32, #tpu.memory_space<vmem>>, vector<16x128xf32>
    %9 = tpu.concatenate %6, %7, %8 in 1 : vector<16x128xf32>, vector<16x128xf32>, vector<16x128xf32> -> vector<16x384xf32>
    %c0_11 = arith.constant 0 : index
    %c0_12 = arith.constant 0 : index
    %10 = vector.load %arg4[%c0_11, %c0_12] : memref<384x128xf32, #tpu.memory_space<vmem>>, vector<384x128xf32>
    %cst = arith.constant dense<0.000000e+00> : vector<16x128xf32>
    %11 = tpu.matmul %9, %10, %cst {dimension_numbers = #tpu.dot_dimension_numbers<[1], [0], [0], [1], [0, 0, 1, 1], [], []>} : vector<16x384xf32>, vector<384x128xf32>, vector<16x128xf32> -> vector<16x128xf32>
    %c0_13 = arith.constant 0 : index
    %c0_14 = arith.constant 0 : index
    %12 = vector.load %arg5[%c0_13, %c0_14] : memref<1x128xf32, #tpu.memory_space<vmem>>, vector<1x128xf32>
    %13 = vector.broadcast %12 : vector<1x128xf32> to vector<16x128xf32>
    %14 = arith.addf %11, %13 : vector<16x128xf32>
    %cst_15 = arith.constant 0.000000e+00 : f32
    %15 = vector.broadcast %cst_15 : f32 to vector<16x128xf32>
    %16 = arith.maximumf %14, %15 : vector<16x128xf32>
    %c8_i32 = arith.constant 8 : i32
    %17 = arith.muli %arg1, %c8_i32 : i32
    %c8_i32_16 = arith.constant 8 : i32
    %18 = arith.subi %17, %c8_i32_16 : i32
    %19 = tpu.iota {dimensions = array<i32: 0>} : vector<16x1xi32>
    %20 = vector.broadcast %18 : i32 to vector<16x1xi32>
    %21 = arith.addi %20, %19 : vector<16x1xi32>
    %c0_i32 = arith.constant 0 : i32
    %22 = vector.broadcast %c0_i32 : i32 to vector<16x1xi32>
    %23 = arith.cmpi sge, %21, %22 : vector<16x1xi32>
    %cst_17 = arith.constant 0.000000e+00 : f32
    %24 = vector.shape_cast %23 : vector<16x1xi1> to vector<16x1xi1>
    %25 = vector.broadcast %24 : vector<16x1xi1> to vector<16x128xi1>
    %26 = vector.broadcast %cst_17 : f32 to vector<16x128xf32>
    %27 = arith.select %25, %16, %26 : vector<16x128xi1>, vector<16x128xf32>
    %c0_18 = arith.constant 0 : index
    %c0_19 = arith.constant 0 : index
    %28 = vector.load %arg12[%c0_18, %c0_19] : memref<16x128xf32, #tpu.memory_space<vmem>>, vector<16x128xf32>
    tpu.vector_store %arg12[%c0_18, %c0_19], %27 {strides = array<i32>} : memref<16x128xf32, #tpu.memory_space<vmem>>, vector<16x128xf32>,
    %c4_20 = arith.constant 4 : index
    %c0_21 = arith.constant 0 : index
    %29 = vector.load %arg12[%c4_20, %c0_21] : memref<16x128xf32, #tpu.memory_space<vmem>>, vector<8x128xf32>
    %c6_22 = arith.constant 6 : index
    %c0_23 = arith.constant 0 : index
    %30 = vector.load %arg12[%c6_22, %c0_23] : memref<16x128xf32, #tpu.memory_space<vmem>>, vector<8x128xf32>
    %c8_24 = arith.constant 8 : index
    %c0_25 = arith.constant 0 : index
    %31 = vector.load %arg12[%c8_24, %c0_25] : memref<16x128xf32, #tpu.memory_space<vmem>>, vector<8x128xf32>
    %32 = tpu.concatenate %29, %30, %31 in 1 : vector<8x128xf32>, vector<8x128xf32>, vector<8x128xf32> -> vector<8x384xf32>
    %c0_26 = arith.constant 0 : index
    %c0_27 = arith.constant 0 : index
    %33 = vector.load %arg6[%c0_26, %c0_27] : memref<384x128xf32, #tpu.memory_space<vmem>>, vector<384x128xf32>
    %cst_28 = arith.constant dense<0.000000e+00> : vector<8x128xf32>
    %34 = tpu.matmul %32, %33, %cst_28 {dimension_numbers = #tpu.dot_dimension_numbers<[1], [0], [0], [1], [0, 0, 1, 1], [], []>} : vector<8x384xf32>, vector<384x128xf32>, vector<8x128xf32> -> vector<8x128xf32>
    %c0_29 = arith.constant 0 : index
    %c0_30 = arith.constant 0 : index
    %35 = vector.load %arg7[%c0_29, %c0_30] : memref<1x128xf32, #tpu.memory_space<vmem>>, vector<1x128xf32>
    %36 = vector.broadcast %35 : vector<1x128xf32> to vector<8x128xf32>
    %37 = arith.addf %34, %36 : vector<8x128xf32>
    %cst_31 = arith.constant 0.000000e+00 : f32
    %38 = vector.broadcast %cst_31 : f32 to vector<8x128xf32>
    %39 = arith.maximumf %37, %38 : vector<8x128xf32>
    %c0_32 = arith.constant 0 : index
    %c0_33 = arith.constant 0 : index
    %40 = vector.load %arg8[%c0_32, %c0_33] : memref<128x128xf32, #tpu.memory_space<vmem>>, vector<128x128xf32>
    %cst_34 = arith.constant dense<0.000000e+00> : vector<8x128xf32>
    %41 = tpu.matmul %1, %40, %cst_34 {dimension_numbers = #tpu.dot_dimension_numbers<[1], [0], [0], [1], [0, 0, 1, 1], [], []>} : vector<8x128xf32>, vector<128x128xf32>, vector<8x128xf32> -> vector<8x128xf32>
    %c0_35 = arith.constant 0 : index
    %c0_36 = arith.constant 0 : index
    %42 = vector.load %arg9[%c0_35, %c0_36] : memref<1x128xf32, #tpu.memory_space<vmem>>, vector<1x128xf32>
    %43 = vector.broadcast %42 : vector<1x128xf32> to vector<8x128xf32>
    %44 = arith.addf %41, %43 : vector<8x128xf32>
    %45 = arith.addf %39, %44 : vector<8x128xf32>
    %cst_37 = arith.constant 0.000000e+00 : f32
    %46 = vector.broadcast %cst_37 : f32 to vector<8x128xf32>
    %47 = arith.maximumf %45, %46 : vector<8x128xf32>
    %c0_38 = arith.constant 0 : index
    %c0_39 = arith.constant 0 : index
    %c0_40 = arith.constant 0 : index
    %48 = vector.load %arg10[%c0_38, %c0_39, %c0_40] : memref<1x8x128xf32, #tpu.memory_space<vmem>>, vector<1x8x128xf32>
    %49 = vector.shape_cast %48 : vector<1x8x128xf32> to vector<8x128xf32>
    %50 = vector.shape_cast %47 : vector<8x128xf32> to vector<1x8x128xf32>
    tpu.vector_store %arg10[%c0_38, %c0_39, %c0_40], %50 {strides = array<i32>} : memref<1x8x128xf32, #tpu.memory_space<vmem>>, vector<1x8x128xf32>,
    return
  }
  func.func @transform_0(%arg0: i32, %arg1: i32) -> (i32, i32, i32) {
    %c0_i32 = arith.constant 0 : i32
    %c0_i32_0 = arith.constant 0 : i32
    return %arg0, %arg1, %c0_i32 : i32, i32, i32
  }
  func.func @transform_1(%arg0: i32, %arg1: i32) -> (i32, i32, i32) {
    %c0_i32 = arith.constant 0 : i32
    %c0_i32_0 = arith.constant 0 : i32
    return %arg0, %arg1, %c0_i32 : i32, i32, i32
  }
  func.func @transform_2(%arg0: i32, %arg1: i32) -> (i32, i32) {
    %c0_i32 = arith.constant 0 : i32
    %c0_i32_0 = arith.constant 0 : i32
    %c0_i32_1 = arith.constant 0 : i32
    return %c0_i32, %c0_i32_0 : i32, i32
  }
  func.func @transform_3(%arg0: i32, %arg1: i32) -> (i32, i32) {
    %c0_i32 = arith.constant 0 : i32
    %c0_i32_0 = arith.constant 0 : i32
    %c0_i32_1 = arith.constant 0 : i32
    return %c0_i32, %c0_i32_0 : i32, i32
  }
  func.func @transform_4(%arg0: i32, %arg1: i32) -> (i32, i32) {
    %c0_i32 = arith.constant 0 : i32
    %c0_i32_0 = arith.constant 0 : i32
    %c0_i32_1 = arith.constant 0 : i32
    return %c0_i32, %c0_i32_0 : i32, i32
  }
  func.func @transform_5(%arg0: i32, %arg1: i32) -> (i32, i32) {
    %c0_i32 = arith.constant 0 : i32
    %c0_i32_0 = arith.constant 0 : i32
    %c0_i32_1 = arith.constant 0 : i32
    return %c0_i32, %c0_i32_0 : i32, i32
  }
  func.func @transform_6(%arg0: i32, %arg1: i32) -> (i32, i32) {
    %c0_i32 = arith.constant 0 : i32
    %c0_i32_0 = arith.constant 0 : i32
    %c0_i32_1 = arith.constant 0 : i32
    return %c0_i32, %c0_i32_0 : i32, i32
  }
  func.func @transform_7(%arg0: i32, %arg1: i32) -> (i32, i32) {
    %c0_i32 = arith.constant 0 : i32
    %c0_i32_0 = arith.constant 0 : i32
    %c0_i32_1 = arith.constant 0 : i32
    return %c0_i32, %c0_i32_0 : i32, i32
  }
  func.func @transform_8(%arg0: i32, %arg1: i32) -> (i32, i32, i32) {
    %c0_i32 = arith.constant 0 : i32
    %c0_i32_0 = arith.constant 0 : i32
    return %arg0, %arg1, %c0_i32 : i32, i32, i32
  }
}

</mosaic_0001>

<llo_original>
// kernel: tpu_custom_call.1
$region0: #{tpu_custom_call.1}
  #allocation0 [shape = 'u32[]', space=smem, size = 0x4, offset = 0x4, fixed_abs, tag = 'smem constant byte address 0x4 - core index']
  #allocation1 [shape = 'u32[144,128]{1,0:T(1,128)}', space=vmem, size = 0x12000, scoped, tag = 'internal scratch']
  #allocation2 [shape = 'f32[24,128]{1,0:T(8,128)}', space=vmem, size = 0x3000, scoped, tag = 'scratch operand']
  #allocation3 [shape = 'f32[16,128]{1,0:T(8,128)}', space=vmem, size = 0x2000, scoped, tag = 'scratch operand']
  %s0 = inlined_call_operand.hbm [shape: f32[2,16,128], index: 0, kind: input, shape index: {}]
  %s1 = inlined_call_operand.hbm [shape: f32[2,32,128], index: 1, kind: input, shape index: {}]
  %s2 = inlined_call_operand.hbm [shape: f32[384,128], index: 2, kind: input, shape index: {}]
  %s3 = inlined_call_operand.vmem [shape: f32[1,128], index: 3, kind: input, shape index: {}]
  %s4 = inlined_call_operand.hbm [shape: f32[384,128], index: 4, kind: input, shape index: {}]
  %s5 = inlined_call_operand.vmem [shape: f32[1,128], index: 5, kind: input, shape index: {}]
  %s6 = inlined_call_operand.hbm [shape: f32[128,128], index: 6, kind: input, shape index: {}]
  %s7 = inlined_call_operand.vmem [shape: f32[1,128], index: 7, kind: input, shape index: {}]
  %s8 = inlined_call_operand.hbm [shape: f32[2,16,128], index: 8, kind: output, shape index: {}]
  %s9 = sld [smem:[#allocation0]]
  $region85: #{tpu_custom_call.1} parent=0
    _
  %s11 = ssub.s32 1, %s9
  %s12 = scalar_select 0, %s11, %s9
  $region1: #{tpu_custom_call.1} parent=0
    #allocation4 [shape = 'u8[8192]{0}', space=vmem, size = 0x2000, scoped, tag = 'input window, operand 0']
    #allocation5 [shape = 's32[2]{0}', space=sflag, size = 0x8, scoped, tag = 'scoped memory for tpu_custom_call.1']
    #allocation6 [shape = 's32[2]{0}', space=sflag, size = 0x8, scoped, tag = 'scoped memory for tpu_custom_call.1']
    #allocation7 [shape = 'u8[16384]{0}', space=vmem, size = 0x4000, scoped, tag = 'input window, operand 1']
    #allocation8 [shape = 's32[2]{0}', space=sflag, size = 0x8, scoped, tag = 'scoped memory for tpu_custom_call.1']
    #allocation9 [shape = 'u8[196608]{0}', space=vmem, size = 0x30000, scoped, tag = 'input window, operand 2, single buffered']
    #allocation10 [shape = 'u8[196608]{0}', space=vmem, size = 0x30000, scoped, tag = 'input window, operand 4, single buffered']
    #allocation11 [shape = 's32[1]{0}', space=sflag, size = 0x4, scoped, tag = 'scoped memory for tpu_custom_call.1']
    #allocation12 [shape = 'u8[65536]{0}', space=vmem, size = 0x10000, scoped, tag = 'input window, operand 6, single buffered']
    #allocation13 [shape = 'u8[8192]{0}', space=vmem, size = 0x2000, scoped, tag = 'output window, operand 0']
    %13 = vsyncpa [#allocation5], 0
    %s14 = scalar_lea.sflag [#allocation5], 1
    %15 = vsyncpa %s14, 0
    %16 = vsyncpa [#allocation8], 0
    %s17 = scalar_lea.sflag [#allocation8], 1
    %18 = vsyncpa %s17, 0
    %19 = vsyncpa [#allocation11], 0
    %20 = vsyncpa [#allocation6], 0
    %s21 = scalar_lea.sflag [#allocation6], 1
    %22 = vsyncpa %s21, 0
    loop: start=0, step=1, limit=6
    $region2: #{tpu_custom_call.1} parent=1 // loop_pre_header
      _
    $region3: #{tpu_custom_call.1} parent=1 // loop_header
      %s24 = sphi 0, %s28
      %p25 = scmp.ge.s32.totalorder %s24, 6
      %s31 = sphi 0, %s43
      %s32 = sphi 0, %s39
      %s33 = sphi 0, %s31
      %s34 = sphi 0, %s32
      %s35 = sphi 0, %s33
      %s36 = sphi 0, %s34
      %s48 = sphi 0, %s50
      %s51 = sphi 0, %s48
      %s52 = sphi 0, %s51
      %s68 = sphi 0, %s52
      %s76 = sphi 0, %s78
      %s79 = sphi 0, %s76
      %s80 = sphi 0, %s79
      %s96 = sphi 0, %s80
      %s100 = sphi 0, %s100
      %s102 = sphi 0, %s100
      %s103 = sphi 0, %s102
      %s117 = sphi 0, %s103
      %s121 = sphi 0, %s121
      %s123 = sphi 0, %s121
      %s124 = sphi 0, %s123
      %s138 = sphi 0, %s124
      %s142 = sphi 0, %s142
      %s144 = sphi 0, %s142
      %s145 = sphi 0, %s144
      %s159 = sphi 0, %s145
      %s163 = sphi 0, %s163
      %s165 = sphi 0, %s163
      %s166 = sphi 0, %s165
      %s180 = sphi 0, %s166
      %s184 = sphi 0, %s184
      %s186 = sphi 0, %s184
      %s187 = sphi 0, %s186
      %s201 = sphi 0, %s187
      %s205 = sphi 0, %s205
      %s207 = sphi 0, %s205
      %s208 = sphi 0, %s207
      %s222 = sphi 0, %s208
      %s230 = sphi 0, %s232
      %s233 = sphi 0, %s230
      %s234 = sphi 0, %s233
      %s250 = sphi 0, %s234
    $region4: #{tpu_custom_call.1} parent=1 // loop_header_branch
      %27 = sbr.rel (%p25) target = $region8
    $region5: #{tpu_custom_call.1} parent=1 // loop_body
      %s29 = ssub.s32 %s24, 1
      %s30 = ssub.s32 %s24, 2
      %s37 = sadd.s32 1, %s32
      %p38 = scmp.ge.s32.totalorder %s37, 2
      %s39 = scalar_select %p38, 0, %s37
      %s40 = sadd.s32 1, %s31
      %s41 = scalar_select %p38, %s40, %s31
      %p42 = scmp.ge.s32.totalorder %s41, 2
      %s43 = scalar_select %p42, 0, %s41
      %s44 = ssub.s32 %s31, %s43
      %s45 = ssub.s32 %s32, %s39
      %s46 = sor.u32 %s44, %s45
      %p47 = scmp.eq.s32.totalorder %s46, 0
      %s49 = sadd.s32 %s48, 1
      %s50 = scalar_select %p47, %s48, %s49
      %p53 = pneg %p47
      %p54 = scmp.eq.s32.totalorder %s24, 3
      %p55 = por %p53, %p54
      %p56 = scmp.ne.s32.totalorder %s48, %s51
      %p57 = scmp.eq.s32.totalorder %s24, 0
      %p58 = por %p56, %p57
      %p59 = scmp.ne.s32.totalorder %s48, %s51
      %p60 = scmp.eq.s32.totalorder %s29, 3
      %p61 = por %p59, %p60
      %p62 = scmp.ne.s32.totalorder %s51, %s52
      %p63 = scmp.eq.s32.totalorder %s29, 0
      %p64 = por %p62, %p63
      %p65 = scmp.ne.s32.totalorder %s51, %s52
      %p66 = scmp.eq.s32.totalorder %s30, 3
      %p67 = por %p65, %p66
      %p69 = scmp.ne.s32.totalorder %s52, %s68
      %p70 = scmp.eq.s32.totalorder %s30, 0
      %p71 = por %p69, %p70
      %s72 = ssub.s32 %s31, %s43
      %s73 = ssub.s32 %s32, %s39
      %s74 = sor.u32 %s72, %s73
      %p75 = scmp.eq.s32.totalorder %s74, 0
      %s77 = sadd.s32 %s76, 1
      %s78 = scalar_select %p75, %s76, %s77
      %p81 = pneg %p75
      %p82 = scmp.eq.s32.totalorder %s24, 3
      %p83 = por %p81, %p82
      %p84 = scmp.ne.s32.totalorder %s76, %s79
      %p85 = scmp.eq.s32.totalorder %s24, 0
      %p86 = por %p84, %p85
      %p87 = scmp.ne.s32.totalorder %s76, %s79
      %p88 = scmp.eq.s32.totalorder %s29, 3
      %p89 = por %p87, %p88
      %p90 = scmp.ne.s32.totalorder %s79, %s80
      %p91 = scmp.eq.s32.totalorder %s29, 0
      %p92 = por %p90, %p91
      %p93 = scmp.ne.s32.totalorder %s79, %s80
      %p94 = scmp.eq.s32.totalorder %s30, 3
      %p95 = por %p93, %p94
      %p97 = scmp.ne.s32.totalorder %s80, %s96
      %p98 = scmp.eq.s32.totalorder %s30, 0
      %p99 = por %p97, %p98
      %s101 = sadd.s32 %s100, 1
      %p104 = scmp.eq.s32.totalorder %s24, 3
      %p105 = scmp.ne.s32.totalorder %s100, %s102
      %p106 = scmp.eq.s32.totalorder %s24, 0
      %p107 = por %p105, %p106
      %p108 = scmp.ne.s32.totalorder %s100, %s102
      %p109 = scmp.eq.s32.totalorder %s29, 3
      %p110 = por %p108, %p109
      %p111 = scmp.ne.s32.totalorder %s102, %s103
      %p112 = scmp.eq.s32.totalorder %s29, 0
      %p113 = por %p111, %p112
      %p114 = scmp.ne.s32.totalorder %s102, %s103
      %p115 = scmp.eq.s32.totalorder %s30, 3
      %p116 = por %p114, %p115
      %p118 = scmp.ne.s32.totalorder %s103, %s117
      %p119 = scmp.eq.s32.totalorder %s30, 0
      %p120 = por %p118, %p119
      %s122 = sadd.s32 %s121, 1
      %p125 = scmp.eq.s32.totalorder %s24, 3
      %p126 = scmp.ne.s32.totalorder %s121, %s123
      %p127 = scmp.eq.s32.totalorder %s24, 0
      %p128 = por %p126, %p127
      %p129 = scmp.ne.s32.totalorder %s121, %s123
      %p130 = scmp.eq.s32.totalorder %s29, 3
      %p131 = por %p129, %p130
      %p132 = scmp.ne.s32.totalorder %s123, %s124
      %p133 = scmp.eq.s32.totalorder %s29, 0
      %p134 = por %p132, %p133
      %p135 = scmp.ne.s32.totalorder %s123, %s124
      %p136 = scmp.eq.s32.totalorder %s30, 3
      %p137 = por %p135, %p136
      %p139 = scmp.ne.s32.totalorder %s124, %s138
      %p140 = scmp.eq.s32.totalorder %s30, 0
      %p141 = por %p139, %p140
      %s143 = sadd.s32 %s142, 1
      %p146 = scmp.eq.s32.totalorder %s24, 3
      %p147 = scmp.ne.s32.totalorder %s142, %s144
      %p148 = scmp.eq.s32.totalorder %s24, 0
      %p149 = por %p147, %p148
      %p150 = scmp.ne.s32.totalorder %s142, %s144
      %p151 = scmp.eq.s32.totalorder %s29, 3
      %p152 = por %p150, %p151
      %p153 = scmp.ne.s32.totalorder %s144, %s145
      %p154 = scmp.eq.s32.totalorder %s29, 0
      %p155 = por %p153, %p154
      %p156 = scmp.ne.s32.totalorder %s144, %s145
      %p157 = scmp.eq.s32.totalorder %s30, 3
      %p158 = por %p156, %p157
      %p160 = scmp.ne.s32.totalorder %s145, %s159
      %p161 = scmp.eq.s32.totalorder %s30, 0
      %p162 = por %p160, %p161
      %s164 = sadd.s32 %s163, 1
      %p167 = scmp.eq.s32.totalorder %s24, 3
      %p168 = scmp.ne.s32.totalorder %s163, %s165
      %p169 = scmp.eq.s32.totalorder %s24, 0
      %p170 = por %p168, %p169
      %p171 = scmp.ne.s32.totalorder %s163, %s165
      %p172 = scmp.eq.s32.totalorder %s29, 3
      %p173 = por %p171, %p172
      %p174 = scmp.ne.s32.totalorder %s165, %s166
      %p175 = scmp.eq.s32.totalorder %s29, 0
      %p176 = por %p174, %p175
      %p177 = scmp.ne.s32.totalorder %s165, %s166
      %p178 = scmp.eq.s32.totalorder %s30, 3
      %p179 = por %p177, %p178
      %p181 = scmp.ne.s32.totalorder %s166, %s180
      %p182 = scmp.eq.s32.totalorder %s30, 0
      %p183 = por %p181, %p182
      %s185 = sadd.s32 %s184, 1
      %p188 = scmp.eq.s32.totalorder %s24, 3
      %p189 = scmp.ne.s32.totalorder %s184, %s186
      %p190 = scmp.eq.s32.totalorder %s24, 0
      %p191 = por %p189, %p190
      %p192 = scmp.ne.s32.totalorder %s184, %s186
      %p193 = scmp.eq.s32.totalorder %s29, 3
      %p194 = por %p192, %p193
      %p195 = scmp.ne.s32.totalorder %s186, %s187
      %p196 = scmp.eq.s32.totalorder %s29, 0
      %p197 = por %p195, %p196
      %p198 = scmp.ne.s32.totalorder %s186, %s187
      %p199 = scmp.eq.s32.totalorder %s30, 3
      %p200 = por %p198, %p199
      %p202 = scmp.ne.s32.totalorder %s187, %s201
      %p203 = scmp.eq.s32.totalorder %s30, 0
      %p204 = por %p202, %p203
      %s206 = sadd.s32 %s205, 1
      %p209 = scmp.eq.s32.totalorder %s24, 3
      %p210 = scmp.ne.s32.totalorder %s205, %s207
      %p211 = scmp.eq.s32.totalorder %s24, 0
      %p212 = por %p210, %p211
      %p213 = scmp.ne.s32.totalorder %s205, %s207
      %p214 = scmp.eq.s32.totalorder %s29, 3
      %p215 = por %p213, %p214
      %p216 = scmp.ne.s32.totalorder %s207, %s208
      %p217 = scmp.eq.s32.totalorder %s29, 0
      %p218 = por %p216, %p217
      %p219 = scmp.ne.s32.totalorder %s207, %s208
      %p220 = scmp.eq.s32.totalorder %s30, 3
      %p221 = por %p219, %p220
      %p223 = scmp.ne.s32.totalorder %s208, %s222
      %p224 = scmp.eq.s32.totalorder %s30, 0
      %p225 = por %p223, %p224
      %s226 = ssub.s32 %s31, %s43
      %s227 = ssub.s32 %s32, %s39
      %s228 = sor.u32 %s226, %s227
      %p229 = scmp.eq.s32.totalorder %s228, 0
      %s231 = sadd.s32 %s230, 1
      %s232 = scalar_select %p229, %s230, %s231
      %p235 = pneg %p229
      %p236 = scmp.eq.s32.totalorder %s24, 3
      %p237 = por %p235, %p236
      %p238 = scmp.ne.s32.totalorder %s230, %s233
      %p239 = scmp.eq.s32.totalorder %s24, 0
      %p240 = por %p238, %p239
      %p241 = scmp.ne.s32.totalorder %s230, %s233
      %p242 = scmp.eq.s32.totalorder %s29, 3
      %p243 = por %p241, %p242
      %p244 = scmp.ne.s32.totalorder %s233, %s234
      %p245 = scmp.eq.s32.totalorder %s29, 0
      %p246 = por %p244, %p245
      %p247 = scmp.ne.s32.totalorder %s233, %s234
      %p248 = scmp.eq.s32.totalorder %s30, 3
      %p249 = por %p247, %p248
      %p251 = scmp.ne.s32.totalorder %s234, %s250
      %p252 = scmp.eq.s32.totalorder %s30, 0
      %p253 = por %p251, %p252
      %p254 = scmp.le.s32.totalorder 1, %s24
      %p255 = scmp.lt.s32.totalorder %s24, 5
      %p256 = pnand %p254, %p255
      %p257 = pneg %p256
      // Predicated region
      $region9: #{tpu_custom_call.1} parent=5 // pred_check
        _
      $region10: #{tpu_custom_call.1} parent=5 // pred_check_branch
        %259 = sbr.rel (%p256) target = $region12
      $region11: #{tpu_custom_call.1} parent=5 // pred_region
        %s260 = ssub.s32 %s24, 1
        // Predicated region
        $region13: #{tpu_custom_call.1} parent=11 // pred_check
          %p261 = pneg %p113
        $region14: #{tpu_custom_call.1} parent=11 // pred_check_branch
          %263 = sbr.rel (%p261) target = $region16
        $region15: #{tpu_custom_call.1} parent=11 // pred_region
          %s265 = ssub.s32 6144, 6144
          %266 = vsyncadd [#allocation8], %s265
          %s267 = sshll.u32 [#allocation9], 4
          %s268 = int_to_ptr.vmem [resolvable:$true] %s267
          %273 = dma.hbm_to_vmem [thread:$0]  %s2, 6144, %s268, [#allocation8], 128, 128, 8
        $region16: #{tpu_custom_call.1} parent=11 // pred_fallthru
          _
        // Predicated region
        $region17: #{tpu_custom_call.1} parent=11 // pred_check
          %p274 = pneg %p134
        $region18: #{tpu_custom_call.1} parent=11 // pred_check_branch
          %276 = sbr.rel (%p274) target = $region20
        $region19: #{tpu_custom_call.1} parent=11 // pred_region
          _
        $region20: #{tpu_custom_call.1} parent=11 // pred_fallthru
          _
        // Predicated region
        $region21: #{tpu_custom_call.1} parent=11 // pred_check
          %p277 = pneg %p155
        $region22: #{tpu_custom_call.1} parent=11 // pred_check_branch
          %279 = sbr.rel (%p277) target = $region24
        $region23: #{tpu_custom_call.1} parent=11 // pred_region
          %s281 = ssub.s32 6144, 6144
          %282 = vsyncadd [#allocation11], %s281
          %s283 = sshll.u32 [#allocation10], 4
          %s284 = int_to_ptr.vmem [resolvable:$true] %s283
          %289 = dma.hbm_to_vmem [thread:$0]  %s4, 6144, %s284, [#allocation11], 128, 128, 8
        $region24: #{tpu_custom_call.1} parent=11 // pred_fallthru
          _
        // Predicated region
        $region25: #{tpu_custom_call.1} parent=11 // pred_check
          %p290 = pneg %p176
        $region26: #{tpu_custom_call.1} parent=11 // pred_check_branch
          %292 = sbr.rel (%p290) target = $region28
        $region27: #{tpu_custom_call.1} parent=11 // pred_region
          _
        $region28: #{tpu_custom_call.1} parent=11 // pred_fallthru
          _
        // Predicated region
        $region29: #{tpu_custom_call.1} parent=11 // pred_check
          %p293 = pneg %p197
        $region30: #{tpu_custom_call.1} parent=11 // pred_check_branch
          %295 = sbr.rel (%p293) target = $region32
        $region31: #{tpu_custom_call.1} parent=11 // pred_region
          %s297 = ssub.s32 2048, 2048
          %298 = vsyncadd [#allocation11], %s297
          %s299 = sshll.u32 [#allocation12], 4
          %s300 = int_to_ptr.vmem [resolvable:$true] %s299
          %305 = dma.hbm_to_vmem [thread:$0]  %s6, 2048, %s300, [#allocation11], 128, 128, 8
        $region32: #{tpu_custom_call.1} parent=11 // pred_fallthru
          _
        // Predicated region
        $region33: #{tpu_custom_call.1} parent=11 // pred_check
          %p306 = pneg %p218
        $region34: #{tpu_custom_call.1} parent=11 // pred_check_branch
          %308 = sbr.rel (%p306) target = $region36
        $region35: #{tpu_custom_call.1} parent=11 // pred_region
          _
        $region36: #{tpu_custom_call.1} parent=11 // pred_fallthru
          _
      $region12: #{tpu_custom_call.1} parent=5 // pred_fallthru
        _
      %p309 = scmp.lt.s32.totalorder %s24, 4
      // Predicated region
      $region37: #{tpu_custom_call.1} parent=5 // pred_check
        %p310 = pneg %p309
      $region38: #{tpu_custom_call.1} parent=5 // pred_check_branch
        %312 = sbr.rel (%p310) target = $region40
      $region39: #{tpu_custom_call.1} parent=5 // pred_region
        // Predicated region
        $region41: #{tpu_custom_call.1} parent=39 // pred_check
          %p313 = pneg %p58
        $region42: #{tpu_custom_call.1} parent=39 // pred_check_branch
          %315 = sbr.rel (%p313) target = $region44
        $region43: #{tpu_custom_call.1} parent=39 // pred_region
          %s316 = sand.u32 %s48, 1
          %s317 = scalar_lea.sflag [#allocation5], %s316
          %s318 = sand.u32 %s48, 1
          %s319 = smul.addr %s318, 8
          %s320 = scalar_lea.vmem [#allocation4], %s319
          %s322 = ssub.s32 128, 128
          %323 = vsyncadd %s317, %s322
          %s324 = smul.addr %s31, 2
          %s325 = sadd.s32 %s32, %s324
          %s326 = smul.addr %s325, 128
          %s327 = scalar_lea.hbm %s0, %s326
          %s329 = sshll.u32 %s320, 4
          %s330 = int_to_ptr.vmem [resolvable:$true] %s329
          %332 = dma.hbm_to_vmem [thread:$0]  %s327, 128, %s330, %s317
        $region44: #{tpu_custom_call.1} parent=39 // pred_fallthru
          _
        // Predicated region
        $region45: #{tpu_custom_call.1} parent=39 // pred_check
          %p333 = pneg %p86
        $region46: #{tpu_custom_call.1} parent=39 // pred_check_branch
          %335 = sbr.rel (%p333) target = $region48
        $region47: #{tpu_custom_call.1} parent=39 // pred_region
          %s336 = sand.u32 %s24, 1
          %s337 = scalar_lea.sflag [#allocation8], %s336
          %s338 = sand.u32 %s76, 1
          %s339 = smul.addr %s338, 16
          %s340 = scalar_lea.vmem [#allocation7], %s339
          %s341 = smul.u32 2, %s32
          %s343 = ssub.s32 256, 256
          %344 = vsyncadd %s337, %s343
          %s345 = smul.addr %s31, 4
          %s346 = sadd.s32 %s341, %s345
          %s347 = smul.addr %s346, 128
          %s348 = scalar_lea.hbm %s1, %s347
          %s349 = sshll.u32 %s340, 4
          %s350 = int_to_ptr.vmem [resolvable:$true] %s349
          %355 = dma.hbm_to_vmem [thread:$0]  %s348, 256, %s350, %s337, 128, 128, 8
        $region48: #{tpu_custom_call.1} parent=39 // pred_fallthru
          _
      $region40: #{tpu_custom_call.1} parent=5 // pred_fallthru
        _
      %p356 = scmp.le.s32.totalorder 1, %s24
      %p357 = scmp.lt.s32.totalorder %s24, 5
      %p358 = pnand %p356, %p357
      %p359 = pneg %p358
      // Predicated region
      $region49: #{tpu_custom_call.1} parent=5 // pred_check
        _
      $region50: #{tpu_custom_call.1} parent=5 // pred_check_branch
        %361 = sbr.rel (%p358) target = $region52
      $region51: #{tpu_custom_call.1} parent=5 // pred_region
        %s362 = ssub.s32 %s24, 1
        %s363 = sand.u32 %s51, 1
        %s364 = scalar_lea.sflag [#allocation5], %s363
        %s365 = sand.u32 %s51, 1
        %s366 = smul.addr %s365, 8
        %s367 = scalar_lea.vmem [#allocation4], %s366
        // Predicated region
        $region53: #{tpu_custom_call.1} parent=51 // pred_check
          %p368 = pneg %p64
        $region54: #{tpu_custom_call.1} parent=51 // pred_check_branch
          %370 = sbr.rel (%p368) target = $region56
        $region55: #{tpu_custom_call.1} parent=51 // pred_region
          %371 = dma.done %s364, 128
        $region56: #{tpu_custom_call.1} parent=51 // pred_fallthru
          _
        %s372 = sand.u32 %s29, 1
        %s373 = scalar_lea.sflag [#allocation8], %s372
        %s374 = sand.u32 %s79, 1
        %s375 = smul.addr %s374, 16
        %s376 = scalar_lea.vmem [#allocation7], %s375
        // Predicated region
        $region57: #{tpu_custom_call.1} parent=51 // pred_check
          %p377 = pneg %p92
        $region58: #{tpu_custom_call.1} parent=51 // pred_check_branch
          %379 = sbr.rel (%p377) target = $region60
        $region59: #{tpu_custom_call.1} parent=51 // pred_region
          %380 = dma.done %s373, 256
        $region60: #{tpu_custom_call.1} parent=51 // pred_fallthru
          _
        // Predicated region
        $region61: #{tpu_custom_call.1} parent=51 // pred_check
          %p381 = pneg %p113
        $region62: #{tpu_custom_call.1} parent=51 // pred_check_branch
          %383 = sbr.rel (%p381) target = $region64
        $region63: #{tpu_custom_call.1} parent=51 // pred_region
          %384 = dma.done [#allocation8], 6144
        $region64: #{tpu_custom_call.1} parent=51 // pred_fallthru
          _
        // Predicated region
        $region65: #{tpu_custom_call.1} parent=51 // pred_check
          %p385 = pneg %p155
        $region66: #{tpu_custom_call.1} parent=51 // pred_check_branch
          %387 = sbr.rel (%p385) target = $region68
        $region67: #{tpu_custom_call.1} parent=51 // pred_region
          %388 = dma.done [#allocation11], 6144
        $region68: #{tpu_custom_call.1} parent=51 // pred_fallthru
          _
        // Predicated region
        $region69: #{tpu_custom_call.1} parent=51 // pred_check
          %p389 = pneg %p197
        $region70: #{tpu_custom_call.1} parent=51 // pred_check_branch
          %391 = sbr.rel (%p389) target = $region72
        $region71: #{tpu_custom_call.1} parent=51 // pred_region
          %392 = dma.done [#allocation11], 2048
        $region72: #{tpu_custom_call.1} parent=51 // pred_fallthru
          _
        %s393 = sand.u32 %s51, 1
        %s394 = scalar_lea.sflag [#allocation5], %s393
        %s395 = sand.u32 %s51, 1
        %s396 = smul.addr %s395, 8
        %s397 = scalar_lea.vmem [#allocation4], %s396
        %p398 = pneg %p64
        %p399 = pneg %p61
        %s400 = sand.u32 %s29, 1
        %s401 = scalar_lea.sflag [#allocation8], %s400
        %s402 = sand.u32 %s79, 1
        %s403 = smul.addr %s402, 16
        %s404 = scalar_lea.vmem [#allocation7], %s403
        %p405 = pneg %p92
        %p406 = pneg %p89
        %p407 = pneg %p113
        %p408 = pneg %p110
        %p409 = pneg %p134
        %p410 = pneg %p131
        %p411 = pneg %p155
        %p412 = pneg %p152
        %p413 = pneg %p176
        %p414 = pneg %p173
        %p415 = pneg %p197
        %p416 = pneg %p194
        %p417 = pneg %p218
        %p418 = pneg %p215
        %p419 = pneg %p246
        %p420 = pneg %p243
        %s421 = sand.u32 %s233, 1
        %s422 = scalar_lea.sflag [#allocation6], %s421
        %s423 = sand.u32 %s233, 1
        %s424 = smul.addr %s423, 8
        %s425 = scalar_lea.vmem [#allocation13], %s424
        %s426 = smul.u32 2, %s34
        %v427 = vld [vmem:[%s367] sm:$0xff]
        %v428 = vld [vmem:[%s376] sm:$0xff]
        %v429 = vld [vmem:[%s376 + $0x8] sm:$0xff]
        %430 = vst [vmem:[#allocation2] sm:$0xff] %v428
        %431 = vst [vmem:[#allocation2 + $0x8] sm:$0xff] %v429
        %432 = vst [vmem:[#allocation2 + $0x10] sm:$0xff] %v427
        %v433 = vld [vmem:[#allocation2 + $0x4] sm:$0xff]
        %v434 = vld [vmem:[#allocation2 + $0xc] sm:$0xff]
        %v435 = vld [vmem:[#allocation2 + $0x6] sm:$0xff]
        %v436 = vld [vmem:[#allocation2 + $0xe] sm:$0xff]
        %v437 = vld [vmem:[#allocation2 + $0x8] sm:$0xff]
        %v438 = vld [vmem:[#allocation2 + $0x10] sm:$0xff]
        %v439 = vld [vmem:[#allocation9] sm:$0xff]
        %v440 = vld [vmem:[#allocation9 + $0x8] sm:$0xff]
        %v441 = vld [vmem:[#allocation9 + $0x10] sm:$0xff]
        %v442 = vld [vmem:[#allocation9 + $0x18] sm:$0xff]
        %v443 = vld [vmem:[#allocation9 + $0x20] sm:$0xff]
        %v444 = vld [vmem:[#allocation9 + $0x28] sm:$0xff]
        %v445 = vld [vmem:[#allocation9 + $0x30] sm:$0xff]
        %v446 = vld [vmem:[#allocation9 + $0x38] sm:$0xff]
        %v447 = vld [vmem:[#allocation9 + $0x40] sm:$0xff]
        %v448 = vld [vmem:[#allocation9 + $0x48] sm:$0xff]
        %v449 = vld [vmem:[#allocation9 + $0x50] sm:$0xff]
        %v450 = vld [vmem:[#allocation9 + $0x58] sm:$0xff]
        %v451 = vld [vmem:[#allocation9 + $0x60] sm:$0xff]
        %v452 = vld [vmem:[#allocation9 + $0x68] sm:$0xff]
        %v453 = vld [vmem:[#allocation9 + $0x70] sm:$0xff]
        %v454 = vld [vmem:[#allocation9 + $0x78] sm:$0xff]
        %v455 = vld [vmem:[#allocation9 + $0x80] sm:$0xff]
        %v456 = vld [vmem:[#allocation9 + $0x88] sm:$0xff]
        %v457 = vld [vmem:[#allocation9 + $0x90] sm:$0xff]
        %v458 = vld [vmem:[#allocation9 + $0x98] sm:$0xff]
        %v459 = vld [vmem:[#allocation9 + $0xa0] sm:$0xff]
        %v460 = vld [vmem:[#allocation9 + $0xa8] sm:$0xff]
        %v461 = vld [vmem:[#allocation9 + $0xb0] sm:$0xff]
        %v462 = vld [vmem:[#allocation9 + $0xb8] sm:$0xff]
        %v463 = vld [vmem:[#allocation9 + $0xc0] sm:$0xff]
        %v464 = vld [vmem:[#allocation9 + $0xc8] sm:$0xff]
        %v465 = vld [vmem:[#allocation9 + $0xd0] sm:$0xff]
        %v466 = vld [vmem:[#allocation9 + $0xd8] sm:$0xff]
        %v467 = vld [vmem:[#allocation9 + $0xe0] sm:$0xff]
        %v468 = vld [vmem:[#allocation9 + $0xe8] sm:$0xff]
        %v469 = vld [vmem:[#allocation9 + $0xf0] sm:$0xff]
        %v470 = vld [vmem:[#allocation9 + $0xf8] sm:$0xff]
        %v471 = vld [vmem:[#allocation9 + $0x100] sm:$0xff]
        %v472 = vld [vmem:[#allocation9 + $0x108] sm:$0xff]
        %v473 = vld [vmem:[#allocation9 + $0x110] sm:$0xff]
        %v474 = vld [vmem:[#allocation9 + $0x118] sm:$0xff]
        %v475 = vld [vmem:[#allocation9 + $0x120] sm:$0xff]
        %v476 = vld [vmem:[#allocation9 + $0x128] sm:$0xff]
        %v477 = vld [vmem:[#allocation9 + $0x130] sm:$0xff]
        %v478 = vld [vmem:[#allocation9 + $0x138] sm:$0xff]
        %v479 = vld [vmem:[#allocation9 + $0x140] sm:$0xff]
        %v480 = vld [vmem:[#allocation9 + $0x148] sm:$0xff]
        %v481 = vld [vmem:[#allocation9 + $0x150] sm:$0xff]
        %v482 = vld [vmem:[#allocation9 + $0x158] sm:$0xff]
        %v483 = vld [vmem:[#allocation9 + $0x160] sm:$0xff]
        %v484 = vld [vmem:[#allocation9 + $0x168] sm:$0xff]
        %v485 = vld [vmem:[#allocation9 + $0x170] sm:$0xff]
        %v486 = vld [vmem:[#allocation9 + $0x178] sm:$0xff]
        %v487 = vld [vmem:[%s3] sm:$0x1]
        %v489 = vlaneseq
        %v490 = vshrl.u32 %v489, 7
        %v491 = vsub.s32 0, %v490
        %v492 = vrot.slane %v487, %v491
        %494 = vmatprep.subr.mxu0 0.0
        %495 = vmatpush1.msra.mxu0 %v439
        %496 = vmatprep.subr.mxu0 0.0
        %497 = vmatpush1.msra.mxu0 %v440
        %498 = vmatprep.subr.mxu0 0.0
        %499 = vmatpush1.msra.mxu0 %v441
        %500 = vmatprep.subr.mxu0 0.0
        %501 = vmatpush1.msra.mxu0 %v442
        %502 = vmatprep.subr.mxu0 0.0
        %503 = vmatpush1.msra.mxu0 %v443
        %504 = vmatprep.subr.mxu0 0.0
        %505 = vmatpush1.msra.mxu0 %v444
        %506 = vmatprep.subr.mxu0 0.0
        %507 = vmatpush1.msra.mxu0 %v445
        %508 = vmatprep.subr.mxu0 0.0
        %509 = vmatpush1.msra.mxu0 %v446
        %510 = vmatprep.subr.mxu0 0.0
        %511 = vmatpush1.msra.mxu0 %v447
        %512 = vmatprep.subr.mxu0 0.0
        %513 = vmatpush1.msra.mxu0 %v448
        %514 = vmatprep.subr.mxu0 0.0
        %515 = vmatpush1.msra.mxu0 %v449
        %516 = vmatprep.subr.mxu0 0.0
        %517 = vmatpush1.msra.mxu0 %v450
        %518 = vmatprep.subr.mxu0 0.0
        %519 = vmatpush1.msra.mxu0 %v451
        %520 = vmatprep.subr.mxu0 0.0
        %521 = vmatpush1.msra.mxu0 %v452
        %522 = vmatprep.subr.mxu0 0.0
        %523 = vmatpush1.msra.mxu0 %v453
        %524 = vmatprep.subr.mxu0 0.0
        %525 = vmatpush1.msra.mxu0 %v454
        %526 = vmatprep.subr.mxu0 0.0
        %527 = vmatpush1.msra.mxu0 %v455
        %528 = vmatprep.subr.mxu0 0.0
        %529 = vmatpush1.msra.mxu0 %v456
        %530 = vmatprep.subr.mxu0 0.0
        %531 = vmatpush1.msra.mxu0 %v457
        %532 = vmatprep.subr.mxu0 0.0
        %533 = vmatpush1.msra.mxu0 %v458
        %534 = vmatprep.subr.mxu0 0.0
        %535 = vmatpush1.msra.mxu0 %v459
        %536 = vmatprep.subr.mxu0 0.0
        %537 = vmatpush1.msra.mxu0 %v460
        %538 = vmatprep.subr.mxu0 0.0
        %539 = vmatpush1.msra.mxu0 %v461
        %540 = vmatprep.subr.mxu0 0.0
        %541 = vmatpush1.msra.mxu0 %v462
        %542 = vmatprep.subr.mxu0 0.0
        %543 = vmatpush1.msra.mxu0 %v463
        %544 = vmatprep.subr.mxu0 0.0
        %545 = vmatpush1.msra.mxu0 %v464
        %546 = vmatprep.subr.mxu0 0.0
        %547 = vmatpush1.msra.mxu0 %v465
        %548 = vmatprep.subr.mxu0 0.0
        %549 = vmatpush1.msra.mxu0 %v466
        %550 = vmatprep.subr.mxu0 0.0
        %551 = vmatpush1.msra.mxu0 %v467
        %552 = vmatprep.subr.mxu0 0.0
        %553 = vmatpush1.msra.mxu0 %v468
        %554 = vmatprep.subr.mxu0 0.0
        %555 = vmatpush1.msra.mxu0 %v469
        %556 = vmatprep.subr.mxu0 0.0
        %557 = vmatpush1.msra.mxu0 %v470
        %558 = vmatprep.mubr.f32.mxu0 %v435
        %559 = vmatmul.mubr.f32.gmra.mrb[0].mxu0 %v433
        %v560 = vpop.f32.mrb[0].mxu0
        %v561 = vadd.f32 %v492, %v560
        %v562 = vpop.f32.mrb[0].mxu0
        %563 = vmatprep.mubr.f32.mxu0 %v436
        %564 = vmatmul.mubr.f32.gmra.mrb[0].mxu0 %v434
        %v565 = vpop.f32.mrb[0].mxu0
        %v566 = vadd.f32 %v492, %v565
        %v567 = vpop.f32.mrb[0].mxu0
        %568 = vdwg.mxu0
        %569 = vmatprep.subr.mxu0 0.0
        %570 = vmatpush1.msra.mxu0 %v471
        %571 = vmatprep.subr.mxu0 0.0
        %572 = vmatpush1.msra.mxu0 %v472
        %573 = vmatprep.subr.mxu0 0.0
        %574 = vmatpush1.msra.mxu0 %v473
        %575 = vmatprep.subr.mxu0 0.0
        %576 = vmatpush1.msra.mxu0 %v474
        %577 = vmatprep.subr.mxu0 0.0
        %578 = vmatpush1.msra.mxu0 %v475
        %579 = vmatprep.subr.mxu0 0.0
        %580 = vmatpush1.msra.mxu0 %v476
        %581 = vmatprep.subr.mxu0 0.0
        %582 = vmatpush1.msra.mxu0 %v477
        %583 = vmatprep.subr.mxu0 0.0
        %584 = vmatpush1.msra.mxu0 %v478
        %585 = vmatprep.subr.mxu0 0.0
        %586 = vmatpush1.msra.mxu0 %v479
        %587 = vmatprep.subr.mxu0 0.0
        %588 = vmatpush1.msra.mxu0 %v480
        %589 = vmatprep.subr.mxu0 0.0
        %590 = vmatpush1.msra.mxu0 %v481
        %591 = vmatprep.subr.mxu0 0.0
        %592 = vmatpush1.msra.mxu0 %v482
        %593 = vmatprep.subr.mxu0 0.0
        %594 = vmatpush1.msra.mxu0 %v483
        %595 = vmatprep.subr.mxu0 0.0
        %596 = vmatpush1.msra.mxu0 %v484
        %597 = vmatprep.subr.mxu0 0.0
        %598 = vmatpush1.msra.mxu0 %v485
        %599 = vmatprep.subr.mxu0 0.0
        %600 = vmatpush1.msra.mxu0 %v486
        %601 = vmatprep.subr.mxu0 0.0
        %602 = vmatpush1.msra.mxu0 0.0
        %603 = vmatprep.subr.mxu0 0.0
        %604 = vmatpush1.msra.mxu0 0.0
        %605 = vmatprep.subr.mxu0 0.0
        %606 = vmatpush1.msra.mxu0 0.0
        %607 = vmatprep.subr.mxu0 0.0
        %608 = vmatpush1.msra.mxu0 0.0
        %609 = vmatprep.subr.mxu0 0.0
        %610 = vmatpush1.msra.mxu0 0.0
        %611 = vmatprep.subr.mxu0 0.0
        %612 = vmatpush1.msra.mxu0 0.0
        %613 = vmatprep.subr.mxu0 0.0
        %614 = vmatpush1.msra.mxu0 0.0
        %615 = vmatprep.subr.mxu0 0.0
        %616 = vmatpush1.msra.mxu0 0.0
        %617 = vmatprep.subr.mxu0 0.0
        %618 = vmatpush1.msra.mxu0 0.0
        %619 = vmatprep.subr.mxu0 0.0
        %620 = vmatpush1.msra.mxu0 0.0
        %621 = vmatprep.subr.mxu0 0.0
        %622 = vmatpush1.msra.mxu0 0.0
        %623 = vmatprep.subr.mxu0 0.0
        %624 = vmatpush1.msra.mxu0 0.0
        %625 = vmatprep.subr.mxu0 0.0
        %626 = vmatpush1.msra.mxu0 0.0
        %627 = vmatprep.subr.mxu0 0.0
        %628 = vmatpush1.msra.mxu0 0.0
        %629 = vmatprep.subr.mxu0 0.0
        %630 = vmatpush1.msra.mxu0 0.0
        %631 = vmatprep.subr.mxu0 0.0
        %632 = vmatpush1.msra.mxu0 0.0
        %633 = vmatprep.mubr.f32.mxu0 0.0
        %634 = vmatmul.mubr.f32.gmra.mrb[0].mxu0 %v437
        %v635 = vpop.f32.mrb[0].mxu0
        %v636 = vadd.f32 %v561, %v635
        %v637 = vpop.f32.mrb[0].mxu0
        %638 = vmatprep.mubr.f32.mxu0 0.0
        %639 = vmatmul.mubr.f32.gmra.mrb[0].mxu0 %v438
        %v640 = vpop.f32.mrb[0].mxu0
        %v641 = vadd.f32 %v566, %v640
        %v642 = vpop.f32.mrb[0].mxu0
        %643 = vdwg.mxu0
        %v644 = vmax.f32 %v636, 0.0
        %v645 = vmax.f32 %v641, 0.0
        %s646 = smul.u32 %s34, 8
        %s647 = ssub.s32 %s646, 8
        %v648 = vlaneseq
        %v649 = vshrl.u32 %v648, 7
        %v650 = vadd.s32 %v649, 8
        %v651 = vstv %s647
        %v652 = vadd.s32 %v651, %v649
        %v653 = vadd.s32 %v651, %v650
        %vm654 = vcmp.ge.s32.totalorder %v652, 0
        %vm655 = vcmp.ge.s32.totalorder %v653, 0
        %v656 = vsel %vm654, 1, 0
        %v657 = vsel %vm655, 1, 0
        %vm658 = vcmp.eq.s32.totalorder %v656, 1
        %vm659 = vcmp.eq.s32.totalorder %v657, 1
        %v660 = vsel %vm658, %v644, 0.0
        %v661 = vsel %vm659, %v645, 0.0
        %662 = vst [vmem:[#allocation3] sm:$0xff] %v660
        %663 = vst [vmem:[#allocation3 + $0x8] sm:$0xff] %v661
        %v664 = vld [vmem:[#allocation3 + $0x4] sm:$0xff]
        %v665 = vld [vmem:[#allocation3 + $0x6] sm:$0xff]
        %v666 = vld [vmem:[#allocation3 + $0x8] sm:$0xff]
        %v667 = vld [vmem:[#allocation10] sm:$0xff]
        %v668 = vld [vmem:[#allocation10 + $0x8] sm:$0xff]
        %v669 = vld [vmem:[#allocation10 + $0x10] sm:$0xff]
        %v670 = vld [vmem:[#allocation10 + $0x18] sm:$0xff]
        %v671 = vld [vmem:[#allocation10 + $0x20] sm:$0xff]
        %v672 = vld [vmem:[#allocation10 + $0x28] sm:$0xff]
        %v673 = vld [vmem:[#allocation10 + $0x30] sm:$0xff]
        %v674 = vld [vmem:[#allocation10 + $0x38] sm:$0xff]
        %v675 = vld [vmem:[#allocation10 + $0x40] sm:$0xff]
        %v676 = vld [vmem:[#allocation10 + $0x48] sm:$0xff]
        %v677 = vld [vmem:[#allocation10 + $0x50] sm:$0xff]
        %v678 = vld [vmem:[#allocation10 + $0x58] sm:$0xff]
        %v679 = vld [vmem:[#allocation10 + $0x60] sm:$0xff]
        %v680 = vld [vmem:[#allocation10 + $0x68] sm:$0xff]
        %v681 = vld [vmem:[#allocation10 + $0x70] sm:$0xff]
        %v682 = vld [vmem:[#allocation10 + $0x78] sm:$0xff]
        %v683 = vld [vmem:[#allocation10 + $0x80] sm:$0xff]
        %v684 = vld [vmem:[#allocation10 + $0x88] sm:$0xff]
        %v685 = vld [vmem:[#allocation10 + $0x90] sm:$0xff]
        %v686 = vld [vmem:[#allocation10 + $0x98] sm:$0xff]
        %v687 = vld [vmem:[#allocation10 + $0xa0] sm:$0xff]
        %v688 = vld [vmem:[#allocation10 + $0xa8] sm:$0xff]
        %v689 = vld [vmem:[#allocation10 + $0xb0] sm:$0xff]
        %v690 = vld [vmem:[#allocation10 + $0xb8] sm:$0xff]
        %v691 = vld [vmem:[#allocation10 + $0xc0] sm:$0xff]
        %v692 = vld [vmem:[#allocation10 + $0xc8] sm:$0xff]
        %v693 = vld [vmem:[#allocation10 + $0xd0] sm:$0xff]
        %v694 = vld [vmem:[#allocation10 + $0xd8] sm:$0xff]
        %v695 = vld [vmem:[#allocation10 + $0xe0] sm:$0xff]
        %v696 = vld [vmem:[#allocation10 + $0xe8] sm:$0xff]
        %v697 = vld [vmem:[#allocation10 + $0xf0] sm:$0xff]
        %v698 = vld [vmem:[#allocation10 + $0xf8] sm:$0xff]
        %v699 = vld [vmem:[#allocation10 + $0x100] sm:$0xff]
        %v700 = vld [vmem:[#allocation10 + $0x108] sm:$0xff]
        %v701 = vld [vmem:[#allocation10 + $0x110] sm:$0xff]
        %v702 = vld [vmem:[#allocation10 + $0x118] sm:$0xff]
        %v703 = vld [vmem:[#allocation10 + $0x120] sm:$0xff]
        %v704 = vld [vmem:[#allocation10 + $0x128] sm:$0xff]
        %v705 = vld [vmem:[#allocation10 + $0x130] sm:$0xff]
        %v706 = vld [vmem:[#allocation10 + $0x138] sm:$0xff]
        %v707 = vld [vmem:[#allocation10 + $0x140] sm:$0xff]
        %v708 = vld [vmem:[#allocation10 + $0x148] sm:$0xff]
        %v709 = vld [vmem:[#allocation10 + $0x150] sm:$0xff]
        %v710 = vld [vmem:[#allocation10 + $0x158] sm:$0xff]
        %v711 = vld [vmem:[#allocation10 + $0x160] sm:$0xff]
        %v712 = vld [vmem:[#allocation10 + $0x168] sm:$0xff]
        %v713 = vld [vmem:[#allocation10 + $0x170] sm:$0xff]
        %v714 = vld [vmem:[#allocation10 + $0x178] sm:$0xff]
        %v715 = vld [vmem:[%s5] sm:$0x1]
        %v717 = vlaneseq
        %v718 = vshrl.u32 %v717, 7
        %v719 = vsub.s32 0, %v718
        %v720 = vrot.slane %v715, %v719
        %722 = vmatprep.subr.mxu0 0.0
        %723 = vmatpush1.msra.mxu0 %v667
        %724 = vmatprep.subr.mxu0 0.0
        %725 = vmatpush1.msra.mxu0 %v668
        %726 = vmatprep.subr.mxu0 0.0
        %727 = vmatpush1.msra.mxu0 %v669
        %728 = vmatprep.subr.mxu0 0.0
        %729 = vmatpush1.msra.mxu0 %v670
        %730 = vmatprep.subr.mxu0 0.0
        %731 = vmatpush1.msra.mxu0 %v671
        %732 = vmatprep.subr.mxu0 0.0
        %733 = vmatpush1.msra.mxu0 %v672
        %734 = vmatprep.subr.mxu0 0.0
        %735 = vmatpush1.msra.mxu0 %v673
        %736 = vmatprep.subr.mxu0 0.0
        %737 = vmatpush1.msra.mxu0 %v674
        %738 = vmatprep.subr.mxu0 0.0
        %739 = vmatpush1.msra.mxu0 %v675
        %740 = vmatprep.subr.mxu0 0.0
        %741 = vmatpush1.msra.mxu0 %v676
        %742 = vmatprep.subr.mxu0 0.0
        %743 = vmatpush1.msra.mxu0 %v677
        %744 = vmatprep.subr.mxu0 0.0
        %745 = vmatpush1.msra.mxu0 %v678
        %746 = vmatprep.subr.mxu0 0.0
        %747 = vmatpush1.msra.mxu0 %v679
        %748 = vmatprep.subr.mxu0 0.0
        %749 = vmatpush1.msra.mxu0 %v680
        %750 = vmatprep.subr.mxu0 0.0
        %751 = vmatpush1.msra.mxu0 %v681
        %752 = vmatprep.subr.mxu0 0.0
        %753 = vmatpush1.msra.mxu0 %v682
        %754 = vmatprep.subr.mxu0 0.0
        %755 = vmatpush1.msra.mxu0 %v683
        %756 = vmatprep.subr.mxu0 0.0
        %757 = vmatpush1.msra.mxu0 %v684
        %758 = vmatprep.subr.mxu0 0.0
        %759 = vmatpush1.msra.mxu0 %v685
        %760 = vmatprep.subr.mxu0 0.0
        %761 = vmatpush1.msra.mxu0 %v686
        %762 = vmatprep.subr.mxu0 0.0
        %763 = vmatpush1.msra.mxu0 %v687
        %764 = vmatprep.subr.mxu0 0.0
        %765 = vmatpush1.msra.mxu0 %v688
        %766 = vmatprep.subr.mxu0 0.0
        %767 = vmatpush1.msra.mxu0 %v689
        %768 = vmatprep.subr.mxu0 0.0
        %769 = vmatpush1.msra.mxu0 %v690
        %770 = vmatprep.subr.mxu0 0.0
        %771 = vmatpush1.msra.mxu0 %v691
        %772 = vmatprep.subr.mxu0 0.0
        %773 = vmatpush1.msra.mxu0 %v692
        %774 = vmatprep.subr.mxu0 0.0
        %775 = vmatpush1.msra.mxu0 %v693
        %776 = vmatprep.subr.mxu0 0.0
        %777 = vmatpush1.msra.mxu0 %v694
        %778 = vmatprep.subr.mxu0 0.0
        %779 = vmatpush1.msra.mxu0 %v695
        %780 = vmatprep.subr.mxu0 0.0
        %781 = vmatpush1.msra.mxu0 %v696
        %782 = vmatprep.subr.mxu0 0.0
        %783 = vmatpush1.msra.mxu0 %v697
        %784 = vmatprep.subr.mxu0 0.0
        %785 = vmatpush1.msra.mxu0 %v698
        %786 = vmatprep.mubr.f32.mxu0 %v665
        %787 = vmatmul.mubr.f32.gmra.mrb[0].mxu0 %v664
        %v788 = vpop.f32.mrb[0].mxu0
        %v789 = vadd.f32 %v720, %v788
        %v790 = vpop.f32.mrb[0].mxu0
        %791 = vdwg.mxu0
        %792 = vmatprep.subr.mxu0 0.0
        %793 = vmatpush1.msra.mxu0 %v699
        %794 = vmatprep.subr.mxu0 0.0
        %795 = vmatpush1.msra.mxu0 %v700
        %796 = vmatprep.subr.mxu0 0.0
        %797 = vmatpush1.msra.mxu0 %v701
        %798 = vmatprep.subr.mxu0 0.0
        %799 = vmatpush1.msra.mxu0 %v702
        %800 = vmatprep.subr.mxu0 0.0
        %801 = vmatpush1.msra.mxu0 %v703
        %802 = vmatprep.subr.mxu0 0.0
        %803 = vmatpush1.msra.mxu0 %v704
        %804 = vmatprep.subr.mxu0 0.0
        %805 = vmatpush1.msra.mxu0 %v705
        %806 = vmatprep.subr.mxu0 0.0
        %807 = vmatpush1.msra.mxu0 %v706
        %808 = vmatprep.subr.mxu0 0.0
        %809 = vmatpush1.msra.mxu0 %v707
        %810 = vmatprep.subr.mxu0 0.0
        %811 = vmatpush1.msra.mxu0 %v708
        %812 = vmatprep.subr.mxu0 0.0
        %813 = vmatpush1.msra.mxu0 %v709
        %814 = vmatprep.subr.mxu0 0.0
        %815 = vmatpush1.msra.mxu0 %v710
        %816 = vmatprep.subr.mxu0 0.0
        %817 = vmatpush1.msra.mxu0 %v711
        %818 = vmatprep.subr.mxu0 0.0
        %819 = vmatpush1.msra.mxu0 %v712
        %820 = vmatprep.subr.mxu0 0.0
        %821 = vmatpush1.msra.mxu0 %v713
        %822 = vmatprep.subr.mxu0 0.0
        %823 = vmatpush1.msra.mxu0 %v714
        %824 = vmatprep.subr.mxu0 0.0
        %825 = vmatpush1.msra.mxu0 0.0
        %826 = vmatprep.subr.mxu0 0.0
        %827 = vmatpush1.msra.mxu0 0.0
        %828 = vmatprep.subr.mxu0 0.0
        %829 = vmatpush1.msra.mxu0 0.0
        %830 = vmatprep.subr.mxu0 0.0
        %831 = vmatpush1.msra.mxu0 0.0
        %832 = vmatprep.subr.mxu0 0.0
        %833 = vmatpush1.msra.mxu0 0.0
        %834 = vmatprep.subr.mxu0 0.0
        %835 = vmatpush1.msra.mxu0 0.0
        %836 = vmatprep.subr.mxu0 0.0
        %837 = vmatpush1.msra.mxu0 0.0
        %838 = vmatprep.subr.mxu0 0.0
        %839 = vmatpush1.msra.mxu0 0.0
        %840 = vmatprep.subr.mxu0 0.0
        %841 = vmatpush1.msra.mxu0 0.0
        %842 = vmatprep.subr.mxu0 0.0
        %843 = vmatpush1.msra.mxu0 0.0
        %844 = vmatprep.subr.mxu0 0.0
        %845 = vmatpush1.msra.mxu0 0.0
        %846 = vmatprep.subr.mxu0 0.0
        %847 = vmatpush1.msra.mxu0 0.0
        %848 = vmatprep.subr.mxu0 0.0
        %849 = vmatpush1.msra.mxu0 0.0
        %850 = vmatprep.subr.mxu0 0.0
        %851 = vmatpush1.msra.mxu0 0.0
        %852 = vmatprep.subr.mxu0 0.0
        %853 = vmatpush1.msra.mxu0 0.0
        %854 = vmatprep.subr.mxu0 0.0
        %855 = vmatpush1.msra.mxu0 0.0
        %856 = vmatprep.mubr.f32.mxu0 0.0
        %857 = vmatmul.mubr.f32.gmra.mrb[0].mxu0 %v666
        %v858 = vpop.f32.mrb[0].mxu0
        %v859 = vadd.f32 %v789, %v858
        %v860 = vpop.f32.mrb[0].mxu0
        %861 = vdwg.mxu0
        %v862 = vmax.f32 %v859, 0.0
        %v863 = vld [vmem:[#allocation12] sm:$0xff]
        %v864 = vld [vmem:[#allocation12 + $0x8] sm:$0xff]
        %v865 = vld [vmem:[#allocation12 + $0x10] sm:$0xff]
        %v866 = vld [vmem:[#allocation12 + $0x18] sm:$0xff]
        %v867 = vld [vmem:[#allocation12 + $0x20] sm:$0xff]
        %v868 = vld [vmem:[#allocation12 + $0x28] sm:$0xff]
        %v869 = vld [vmem:[#allocation12 + $0x30] sm:$0xff]
        %v870 = vld [vmem:[#allocation12 + $0x38] sm:$0xff]
        %v871 = vld [vmem:[#allocation12 + $0x40] sm:$0xff]
        %v872 = vld [vmem:[#allocation12 + $0x48] sm:$0xff]
        %v873 = vld [vmem:[#allocation12 + $0x50] sm:$0xff]
        %v874 = vld [vmem:[#allocation12 + $0x58] sm:$0xff]
        %v875 = vld [vmem:[#allocation12 + $0x60] sm:$0xff]
        %v876 = vld [vmem:[#allocation12 + $0x68] sm:$0xff]
        %v877 = vld [vmem:[#allocation12 + $0x70] sm:$0xff]
        %v878 = vld [vmem:[#allocation12 + $0x78] sm:$0xff]
        %v879 = vld [vmem:[%s7] sm:$0x1]
        %v881 = vlaneseq
        %v882 = vshrl.u32 %v881, 7
        %v883 = vsub.s32 0, %v882
        %v884 = vrot.slane %v879, %v883
        %886 = vmatprep.subr.mxu0 0.0
        %887 = vmatpush1.msra.mxu0 %v863
        %888 = vmatprep.subr.mxu0 0.0
        %889 = vmatpush1.msra.mxu0 %v864
        %890 = vmatprep.subr.mxu0 0.0
        %891 = vmatpush1.msra.mxu0 %v865
        %892 = vmatprep.subr.mxu0 0.0
        %893 = vmatpush1.msra.mxu0 %v866
        %894 = vmatprep.subr.mxu0 0.0
        %895 = vmatpush1.msra.mxu0 %v867
        %896 = vmatprep.subr.mxu0 0.0
        %897 = vmatpush1.msra.mxu0 %v868
        %898 = vmatprep.subr.mxu0 0.0
        %899 = vmatpush1.msra.mxu0 %v869
        %900 = vmatprep.subr.mxu0 0.0
        %901 = vmatpush1.msra.mxu0 %v870
        %902 = vmatprep.subr.mxu0 0.0
        %903 = vmatpush1.msra.mxu0 %v871
        %904 = vmatprep.subr.mxu0 0.0
        %905 = vmatpush1.msra.mxu0 %v872
        %906 = vmatprep.subr.mxu0 0.0
        %907 = vmatpush1.msra.mxu0 %v873
        %908 = vmatprep.subr.mxu0 0.0
        %909 = vmatpush1.msra.mxu0 %v874
        %910 = vmatprep.subr.mxu0 0.0
        %911 = vmatpush1.msra.mxu0 %v875
        %912 = vmatprep.subr.mxu0 0.0
        %913 = vmatpush1.msra.mxu0 %v876
        %914 = vmatprep.subr.mxu0 0.0
        %915 = vmatpush1.msra.mxu0 %v877
        %916 = vmatprep.subr.mxu0 0.0
        %917 = vmatpush1.msra.mxu0 %v878
        %918 = vmatprep.subr.mxu0 0.0
        %919 = vmatpush1.msra.mxu0 0.0
        %920 = vmatprep.subr.mxu0 0.0
        %921 = vmatpush1.msra.mxu0 0.0
        %922 = vmatprep.subr.mxu0 0.0
        %923 = vmatpush1.msra.mxu0 0.0
        %924 = vmatprep.subr.mxu0 0.0
        %925 = vmatpush1.msra.mxu0 0.0
        %926 = vmatprep.subr.mxu0 0.0
        %927 = vmatpush1.msra.mxu0 0.0
        %928 = vmatprep.subr.mxu0 0.0
        %929 = vmatpush1.msra.mxu0 0.0
        %930 = vmatprep.subr.mxu0 0.0
        %931 = vmatpush1.msra.mxu0 0.0
        %932 = vmatprep.subr.mxu0 0.0
        %933 = vmatpush1.msra.mxu0 0.0
        %934 = vmatprep.subr.mxu0 0.0
        %935 = vmatpush1.msra.mxu0 0.0
        %936 = vmatprep.subr.mxu0 0.0
        %937 = vmatpush1.msra.mxu0 0.0
        %938 = vmatprep.subr.mxu0 0.0
        %939 = vmatpush1.msra.mxu0 0.0
        %940 = vmatprep.subr.mxu0 0.0
        %941 = vmatpush1.msra.mxu0 0.0
        %942 = vmatprep.subr.mxu0 0.0
        %943 = vmatpush1.msra.mxu0 0.0
        %944 = vmatprep.subr.mxu0 0.0
        %945 = vmatpush1.msra.mxu0 0.0
        %946 = vmatprep.subr.mxu0 0.0
        %947 = vmatpush1.msra.mxu0 0.0
        %948 = vmatprep.subr.mxu0 0.0
        %949 = vmatpush1.msra.mxu0 0.0
        %950 = vmatprep.mubr.f32.mxu0 0.0
        %951 = vmatmul.mubr.f32.gmra.mrb[0].mxu0 %v427
        %v952 = vpop.f32.mrb[0].mxu0
        %v953 = vadd.f32 %v884, %v952
        %v954 = vpop.f32.mrb[0].mxu0
        %955 = vdwg.mxu0
        %v956 = vadd.f32 %v862, %v953
        %v957 = vmax.f32 %v956, 0.0
        %958 = vst [vmem:[%s425] sm:$0xff] %v957
        %s959 = sand.u32 %s233, 1
        %s960 = scalar_lea.sflag [#allocation6], %s959
        %s961 = sand.u32 %s233, 1
        %s962 = smul.addr %s961, 8
        %s963 = scalar_lea.vmem [#allocation13], %s962
        // Predicated region
        $region73: #{tpu_custom_call.1} parent=51 // pred_check
          %p964 = pneg %p243
        $region74: #{tpu_custom_call.1} parent=51 // pred_check_branch
          %966 = sbr.rel (%p964) target = $region76
        $region75: #{tpu_custom_call.1} parent=51 // pred_region
          %s968 = ssub.s32 128, 128
          %969 = vsyncadd %s960, %s968
          %s970 = smul.addr %s33, 2
          %s971 = sadd.s32 %s34, %s970
          %s972 = smul.addr %s971, 128
          %s973 = scalar_lea.hbm %s8, %s972
          %s975 = sshll.u32 %s963, 4
          %s976 = int_to_ptr.vmem [resolvable:$true] %s975
          %978 = dma.vmem_to_hbm [thread:$0]  %s976, 128, %s973, %s960
        $region76: #{tpu_custom_call.1} parent=51 // pred_fallthru
          _
      $region52: #{tpu_custom_call.1} parent=5 // pred_fallthru
        _
      %p979 = scmp.le.s32.totalorder 2, %s24
      // Predicated region
      $region77: #{tpu_custom_call.1} parent=5 // pred_check
        %p980 = pneg %p979
      $region78: #{tpu_custom_call.1} parent=5 // pred_check_branch
        %982 = sbr.rel (%p980) target = $region80
      $region79: #{tpu_custom_call.1} parent=5 // pred_region
        %s983 = ssub.s32 %s24, 2
        // Predicated region
        $region81: #{tpu_custom_call.1} parent=79 // pred_check
          %p984 = pneg %p249
        $region82: #{tpu_custom_call.1} parent=79 // pred_check_branch
          %986 = sbr.rel (%p984) target = $region84
        $region83: #{tpu_custom_call.1} parent=79 // pred_region
          %s987 = sand.u32 %s234, 1
          %s988 = scalar_lea.sflag [#allocation6], %s987
          %s989 = sand.u32 %s234, 1
          %s990 = smul.addr %s989, 8
          %s991 = scalar_lea.vmem [#allocation13], %s990
          %992 = dma.done %s988, 128
        $region84: #{tpu_custom_call.1} parent=79 // pred_fallthru
          _
      $region80: #{tpu_custom_call.1} parent=5 // pred_fallthru
        _
    $region6: #{tpu_custom_call.1} parent=1 // loop_footer
      %s28 = sadd.s32 1, %s24
    $region7: #{tpu_custom_call.1} parent=1 // loop_footer_branch
      %23 = sbr.rel target = $region3
    $region8: #{tpu_custom_call.1} parent=1 // loop_exit
      _
    %993 = vsyncpa [#allocation5], 1
    %s994 = scalar_lea.sflag [#allocation5], 1
    %995 = vsyncpa %s994, 1
    %996 = vsyncpa [#allocation8], 1
    %s997 = scalar_lea.sflag [#allocation8], 1
    %998 = vsyncpa %s997, 1
    %999 = vsyncpa [#allocation11], 1
    %1000 = vsyncpa [#allocation6], 1
    %s1001 = scalar_lea.sflag [#allocation6], 1
    %1002 = vsyncpa %s1001, 1

</llo_original>
